<compile_context>
chip_gen: v7x
topology: tpu7x:2x2x1
jax: 0.10.0
libtpu: 0.0.40
codegen_flags: <defaults>
</compile_context>

<pallas_src>
import functools
import math

import jax
import jax.numpy as jnp
from jax import lax
from jax.experimental import pallas as pl
from jax.experimental.pallas import tpu as pltpu

N_HEAD = 4


def _rms(t):
    # F.rms_norm(x, (x.size(-1),)) with default eps = finfo(f32).eps, no affine.  f32 math.
    eps = jnp.finfo(jnp.float32).eps
    return t * lax.rsqrt(jnp.mean(t * t, axis=-1, keepdims=True) + eps)


def _row_tile(m):
    # Largest MXU/pipeline-friendly row tile (up to 512 per perf review); full tile if small.
    if m <= 512:
        return m
    for t in (512, 256, 128):
        if m % t == 0:
            return t
    return 256  # grid uses pl.cdiv; Pallas masks the partial edge block


def _hidden_tile(d4):
    # Chunk the 4*D MLP hidden dim so weight chunks + hidden tile fit scoped VMEM (esp. v7x).
    for t in (512, 256, 128):
        if d4 % t == 0 and d4 // t >= 2:
            return t
    return d4


def _cparams(dims, need_bytes):
    # Explicit scoped-VMEM budget once the working set outgrows the conservative default
    # (16/32 MiB); capped below v7x's 64 MiB physical VMEM.  No-op at small shapes.
    if need_bytes > 12 * 1024 * 1024:
        return pltpu.CompilerParams(
            dimension_semantics=dims,
            vmem_limit_bytes=int(min(2 * need_bytes, 60 * 1024 * 1024)))
    return pltpu.CompilerParams(dimension_semantics=dims)


# --------------------- kernel 1: lambda-mix + rms_norm ---------------------

def _mix_norm_kernel(lambdas_ref, x_ref, x0_ref, xmix_ref, xn_ref):
    l0 = lambdas_ref[0]
    l1 = lambdas_ref[1]
    xm = l0 * x_ref[...].astype(jnp.float32) + l1 * x0_ref[...].astype(jnp.float32)
    xmix_ref[...] = xm.astype(xmix_ref.dtype)           # f32 residual stream
    xn_ref[...] = _rms(xm).astype(xn_ref.dtype)         # bf16 MXU operand for QKV/MLP


def _mix_norm(lambdas, x2, x02):
    m, d = x2.shape
    tm = _row_tile(m)
    need = 2 * (3 * tm * d * 4 + tm * d * 2)
    return pl.pallas_call(
        _mix_norm_kernel,
        out_shape=(jax.ShapeDtypeStruct((m, d), jnp.float32),
                   jax.ShapeDtypeStruct((m, d), jnp.bfloat16)),
        grid=(pl.cdiv(m, tm),),
        in_specs=[
            pl.BlockSpec(memory_space=pltpu.MemorySpace.SMEM),   # lambdas (2,) f32 scalars
            pl.BlockSpec((tm, d), lambda i: (i, 0)),
            pl.BlockSpec((tm, d), lambda i: (i, 0)),
        ],
        out_specs=(pl.BlockSpec((tm, d), lambda i: (i, 0)),
                   pl.BlockSpec((tm, d), lambda i: (i, 0))),
        compiler_params=_cparams(("parallel",), need),
    )(lambdas, x2, x02)


# --------------------- kernel 2: attention, grid = (batch, head) ---------------------

def _attn_kernel(lamb_ref, xn_ref, wq_ref, wk_ref, wv_ref, wp_ref, cos_ref, sin_ref,
                 *rest, head_dim, has_v1):
    if has_v1:
        v1_ref, yproj_ref = rest
        v1out_ref = None
    else:
        yproj_ref, v1out_ref = rest
        v1_ref = None

    hi = pl.program_id(1)

    xn = xn_ref[...]                                              # (T, D) bf16 MXU operand
    q = jnp.dot(xn, wq_ref[...], preferred_element_type=jnp.float32)   # (T, Dh) f32
    k = jnp.dot(xn, wk_ref[...], preferred_element_type=jnp.float32)
    v = jnp.dot(xn, wv_ref[...], preferred_element_type=jnp.float32)

    if has_v1:
        # v = (1 - lamb) * v + lamb * v1, written as a single scalar*vector FMA form.
        v = v + lamb_ref[0] * (v1_ref[...].astype(jnp.float32) - v)
    else:
        # v1 is None in the reference => v1 := v and the lambda-mix is the identity (skipped).
        v1out_ref[...] = v.astype(v1out_ref.dtype)

    cosf = cos_ref[...]                                           # (T, Dh) = [cos |  cos]
    sinf = sin_ref[...]                                           # (T, Dh) = [sin | -sin]
    half = head_dim // 2

    def rot(u):                                                   # u*[cos|cos] + swap(u)*[sin|-sin]
        if head_dim % 256 == 0:
            usw = pltpu.roll(u, shift=half, axis=1)               # whole-register XLU rotate
        else:
            usw = jnp.concatenate([u[:, half:], u[:, :half]], axis=1)   # small Dh fallback
        return u * cosf + usw * sinf

    scale = 1.0 / math.sqrt(head_dim)                             # flex_attention default scale
    qr = rot(_rms(q) * scale)                                     # scale folded into q (TxDh)
    kr = rot(_rms(k))

    s = lax.dot_general(qr.astype(jnp.bfloat16), kr.astype(jnp.bfloat16),
                        dimension_numbers=(((1,), (1,)), ((), ())),
                        preferred_element_type=jnp.float32)       # (T, T), no K^T copy
    m = jnp.max(s, axis=-1, keepdims=True)
    p = jnp.exp(s - m)
    l = jnp.sum(p, axis=-1, keepdims=True)
    o = jnp.dot(p.astype(jnp.bfloat16), v.astype(jnp.bfloat16),
                preferred_element_type=jnp.float32) / l           # exact softmax denominator

    # Per-head slice of the output projection, accumulated over the head grid axis
    # directly in the resident f32 output block (no per-head outs list / concat).
    contrib = jnp.dot(o.astype(jnp.bfloat16), wp_ref[...],
                      preferred_element_type=jnp.float32)         # (T, D)

    @pl.when(hi == 0)
    def _():
        yproj_ref[...] = jnp.zeros_like(yproj_ref)

    yproj_ref[...] += contrib


def _attention(lamb, xn3, v1_hm, params, rot_tabs, n_head):
    b, t, d = xn3.shape
    dh = d // n_head
    cosf, sinf = rot_tabs
    has_v1 = v1_hm is not None
    lamb_arr = jnp.reshape(jnp.asarray(lamb, jnp.float32), (1,))
    kern = functools.partial(_attn_kernel, head_dim=dh, has_v1=has_v1)

    in_specs = [
        pl.BlockSpec(memory_space=pltpu.MemorySpace.SMEM),             # lamb (1,) f32 scalar
        pl.BlockSpec((None, t, d), lambda bi, hi: (bi, 0, 0)),         # xn (B, T, D) bf16
        pl.BlockSpec((None, d, dh), lambda bi, hi: (hi, 0, 0)),        # Wq head block
        pl.BlockSpec((None, d, dh), lambda bi, hi: (hi, 0, 0)),        # Wk head block
        pl.BlockSpec((None, d, dh), lambda bi, hi: (hi, 0, 0)),        # Wv head block
        pl.BlockSpec((None, dh, d), lambda bi, hi: (hi, 0, 0)),        # Wproj head block
        pl.BlockSpec((t, dh), lambda bi, hi: (0, 0)),                  # cos (resident)
        pl.BlockSpec((t, dh), lambda bi, hi: (0, 0)),                  # sin (resident)
    ]
    args = [lamb_arr, xn3, params["wq_h"], params["wk_h"], params["wv_h"],
            params["wp_h"], cosf, sinf]

    yproj_spec = pl.BlockSpec((None, t, d), lambda bi, hi: (bi, 0, 0))
    v1_spec = pl.BlockSpec((None, None, t, dh), lambda bi, hi: (bi, hi, 0, 0))

    if has_v1:
        in_specs.append(v1_spec)
        args.append(v1_hm)
        out_shape = jax.ShapeDtypeStruct((b, t, d), jnp.float32)
        out_specs = yproj_spec
    else:
        out_shape = (jax.ShapeDtypeStruct((b, t, d), jnp.float32),
                     jax.ShapeDtypeStruct((b, n_head, t, dh), jnp.float32))
        out_specs = (yproj_spec, v1_spec)

    need = (2 * (t * d * 2 + 4 * d * dh * 2 + t * dh * 4)
            + t * t * 4 + t * d * 4 + t * dh * 4)
    return pl.pallas_call(
        kern,
        out_shape=out_shape,
        grid=(b, n_head),
        in_specs=in_specs,
        out_specs=out_specs,
        compiler_params=_cparams(("parallel", "arbitrary"), need),
    )(*args)


# --------------------- kernel 3: residual + rms_norm + MLP (hidden-dim tiled) ---------------------

def _proj_mlp_kernel(yproj_ref, xmix_ref, wfc_ref, wpr_ref, o_ref, xn_scr, acc_scr):
    j = pl.program_id(1)

    @pl.when(j == 0)
    def _():
        x = xmix_ref[...].astype(jnp.float32) + yproj_ref[...].astype(jnp.float32)
        xn_scr[...] = _rms(x).astype(xn_scr.dtype)        # bf16 MXU operand, computed once
        acc_scr[...] = x                                  # f32 accumulator starts at residual

    h = jnp.dot(xn_scr[...], wfc_ref[...], preferred_element_type=jnp.float32)
    h = jnp.square(jnp.maximum(h, 0.0))                   # relu(.)^2 in f32
    acc_scr[...] += jnp.dot(h.astype(jnp.bfloat16), wpr_ref[...],
                            preferred_element_type=jnp.float32)

    @pl.when(j == pl.num_programs(1) - 1)
    def _():
        o_ref[...] = acc_scr[...].astype(o_ref.dtype)


def _proj_mlp(yproj2, xmix2, wfc_t, wpr_t, out_dtype):
    m, d = xmix2.shape
    d4 = wfc_t.shape[1]
    tm = _row_tile(m)
    tn = _hidden_tile(d4)
    need = (2 * (2 * tm * d * 4 + d * tn * 2 + tn * d * 2 + tm * d * 4)
            + tm * d * 6 + tm * tn * 4)
    return pl.pallas_call(
        _proj_mlp_kernel,
        out_shape=jax.ShapeDtypeStruct((m, d), out_dtype),
        grid=(pl.cdiv(m, tm), d4 // tn),
        in_specs=[
            pl.BlockSpec((tm, d), lambda i, j: (i, 0)),       # attention out-proj result
            pl.BlockSpec((tm, d), lambda i, j: (i, 0)),       # f32 residual stream
            pl.BlockSpec((d, tn), lambda i, j: (0, j)),       # Wfc chunk (bf16)
            pl.BlockSpec((tn, d), lambda i, j: (j, 0)),       # Wproj chunk (bf16)
        ],
        out_specs=pl.BlockSpec((tm, d), lambda i, j: (i, 0)),
        scratch_shapes=[pltpu.VMEM((tm, d), jnp.bfloat16),
                        pltpu.VMEM((tm, d), jnp.float32)],
        compiler_params=_cparams(("parallel", "arbitrary"), need),
    )(yproj2, xmix2, wfc_t, wpr_t)


# --------------------- parameter prep (done ONCE, not per forward) ---------------------

def prepare_block_params(Wq, Wk, Wv, Wp, Wfc, Wpr, n_head=N_HEAD):
    """Pre-transpose torch-Linear (Dout, Din) weights, split into head-major blocks, and
    pre-cast everything to bf16 ONCE (no per-grid-step weight casts inside the kernels)."""
    d = Wq.shape[1]
    dh = d // n_head
    wdt = jnp.bfloat16

    def head_major(w):                       # (D_in, H, Dh) -> (H, D_in, Dh)
        return jnp.transpose(w.T.reshape(d, n_head, dh), (1, 0, 2)).astype(wdt)

    return dict(
        wq_h=head_major(Wq),                                  # (H, D, Dh)
        wk_h=head_major(Wk),
        wv_h=head_major(Wv),
        wp_h=Wp.T.reshape(n_head, dh, d).astype(wdt),         # (H, Dh, D), rows head-major
        wfc_t=Wfc.T.astype(wdt),                              # (D, 4D)
        wpr_t=Wpr.T.astype(wdt),                              # (4D, D)
    )


def rotary_tables(t, head_dim, base=10000.0):
    """Widened, lane-dense rotary tables: cos_full = [cos|cos], sin_full = [sin|-sin]."""
    inv_freq = 1.0 / (base ** (jnp.arange(0, head_dim, 2, dtype=jnp.float32) / head_dim))
    freqs = jnp.outer(jnp.arange(t, dtype=jnp.float32), inv_freq)   # (T, head_dim // 2)
    cos, sin = jnp.cos(freqs), jnp.sin(freqs)
    return (jnp.concatenate([cos, cos], axis=-1),
            jnp.concatenate([sin, -sin], axis=-1))


# --------------------- Block forward (glue: reshapes only on the main path) ---------------------

def block_forward(x, x0, v1, lambdas, lamb, params, rot_tabs, n_head=N_HEAD):
    b, t, d = x.shape
    dh = d // n_head
    m = b * t
    lambdas = jnp.asarray(lambdas, jnp.float32).reshape(2)

    xmix2, xn2 = _mix_norm(lambdas, x.reshape(m, d), x0.reshape(m, d))
    xn3 = xn2.reshape(b, t, d)

    if v1 is None:
        # First block: skip the v1 input and the (1-l)v + l*v1 mix entirely (it is identity).
        yproj3, v1_hm = _attention(lamb, xn3, None, params, rot_tabs, n_head)
        v1_out = jnp.transpose(v1_hm, (0, 2, 1, 3))            # torch layout (B, T, H, Dh)
    else:
        v1_out = v1.reshape(b, t, n_head, dh)
        # TODO(synk): at scale keep v1 head-major (B, H, T, Dh) across blocks to drop this transpose.
        v1_hm = jnp.transpose(v1_out, (0, 2, 1, 3)).astype(jnp.float32)
        yproj3 = _attention(lamb, xn3, v1_hm, params, rot_tabs, n_head)

    out2 = _proj_mlp(yproj3.reshape(m, d), xmix2, params["wfc_t"], params["wpr_t"], x.dtype)
    return out2.reshape(b, t, d), v1_out


# --------------------- pure-JAX reference ---------------------

def block_forward_ref(x, x0, v1, lambdas, lamb, Wq, Wk, Wv, Wp, Wfc, Wpr, n_head=N_HEAD):
    b, t, d = x.shape
    h = n_head
    dh = d // h
    eps = jnp.finfo(jnp.float32).eps
    rms = lambda a: a * lax.rsqrt(jnp.mean(a * a, axis=-1, keepdims=True) + eps)

    xm = lambdas[0] * x + lambdas[1] * x0
    xn = rms(xm)
    q = (xn @ Wq.T).reshape(b, t, h, dh)
    k = (xn @ Wk.T).reshape(b, t, h, dh)
    v = (xn @ Wv.T).reshape(b, t, h, dh)
    if v1 is None:
        v1 = v
    v = (1.0 - lamb) * v + lamb * v1.reshape(b, t, h, dh)
    q, k = rms(q), rms(k)

    inv_freq = 1.0 / (10000.0 ** (jnp.arange(0, dh, 2, dtype=jnp.float32) / dh))
    freqs = jnp.outer(jnp.arange(t, dtype=jnp.float32), inv_freq)
    cos = jnp.cos(freqs)[None, :, None, :]
    sin = jnp.sin(freqs)[None, :, None, :]
    half = dh // 2

    def rot(a):
        a1, a2 = a[..., :half], a[..., half:]
        return jnp.concatenate([a1 * cos + a2 * sin, -a1 * sin + a2 * cos], axis=-1)

    q, k = rot(q), rot(k)
    qt, kt, vt = (a.transpose(0, 2, 1, 3) for a in (q, k, v))
    s = jnp.einsum("bhqd,bhkd->bhqk", qt, kt) / jnp.sqrt(jnp.float32(dh))
    p = jax.nn.softmax(s, axis=-1)
    y = jnp.einsum("bhqk,bhkd->bhqd", p, vt).transpose(0, 2, 1, 3).reshape(b, t, d)

    xa = xm + y @ Wp.T
    mlp = jnp.square(jnp.maximum(rms(xa) @ Wfc.T, 0.0)) @ Wpr.T
    return xa + mlp, v1


# --------------------- main ---------------------

if __name__ == "__main__":
    B, T, D, H = 2, 16, 64, N_HEAD
    Dh = D // H

    key = jax.random.PRNGKey(0)
    ks = jax.random.split(key, 9)
    x = jax.random.normal(ks[0], (B, T, D), jnp.float32)
    x0 = jax.random.normal(ks[1], (B, T, D), jnp.float32)
    Wq = 0.02 * jax.random.normal(ks[2], (D, D), jnp.float32)
    Wk = 0.02 * jax.random.normal(ks[3], (D, D), jnp.float32)
    Wv = 0.02 * jax.random.normal(ks[4], (D, D), jnp.float32)
    # NOTE: the module zero-inits the two c_proj weights; random values here exercise/validate
    # the full kernel path numerically (the forward graph is identical).
    Wp = 0.02 * jax.random.normal(ks[5], (D, D), jnp.float32)
    Wfc = 0.02 * jax.random.normal(ks[6], (4 * D, D), jnp.float32)
    Wpr = 0.02 * jax.random.normal(ks[7], (D, 4 * D), jnp.float32)
    v1_in = 0.1 * jax.random.normal(ks[8], (B, T, H, Dh), jnp.float32)

    lambdas = jnp.array([0.8, 0.2], jnp.float32)   # module init is [1.0, 0.0]
    lamb = jnp.float32(0.5)                        # module init of attn.lamb

    params = prepare_block_params(Wq, Wk, Wv, Wp, Wfc, Wpr, n_head=H)
    rot_tabs = rotary_tables(T, Dh)                # hoisted: static per (T, Dh)

    # Tolerances reflect bf16 MXU operands (f32 accumulate / f32 elementwise / f32 residual).
    YTOL = dict(atol=2e-2, rtol=2e-2)
    VTOL = dict(atol=1e-2, rtol=2e-2)

    # case 1: first block (v1 is None -> v1 = value projection, mix skipped)
    y, v1_out = block_forward(x, x0, None, lambdas, lamb, params, rot_tabs, n_head=H)
    y = jax.block_until_ready(y)
    v1_out = jax.block_until_ready(v1_out)
    y_ref, v1_ref = block_forward_ref(x, x0, None, lambdas, lamb, Wq, Wk, Wv, Wp, Wfc, Wpr, H)
    assert y.shape == (B, T, D) and v1_out.shape == (B, T, H, Dh)
    assert jnp.allclose(y, y_ref, **YTOL), float(jnp.max(jnp.abs(y - y_ref)))
    assert jnp.allclose(v1_out, v1_ref, **VTOL), float(jnp.max(jnp.abs(v1_out - v1_ref)))

    # case 2: later block (explicit v1 is mixed into V and passed through unchanged)
    y2, v1_out2 = block_forward(x, x0, v1_in, lambdas, lamb, params, rot_tabs, n_head=H)
    y2 = jax.block_until_ready(y2)
    v1_out2 = jax.block_until_ready(v1_out2)
    y2_ref, v12_ref = block_forward_ref(x, x0, v1_in, lambdas, lamb, Wq, Wk, Wv, Wp, Wfc, Wpr, H)
    assert jnp.allclose(y2, y2_ref, **YTOL), float(jnp.max(jnp.abs(y2 - y2_ref)))
    assert jnp.allclose(v1_out2, v12_ref, atol=1e-6), "v1 must pass through unchanged"

    print("KERNEL_OK")
</pallas_src>

<mosaic_0001>
module attributes {stable_mosaic.version = 11 : i64} {
  func.func @_mix_norm_kernel(%arg0: i32, %arg1: memref<2xf32, #tpu.memory_space<smem>>, %arg2: memref<32x64xf32, #tpu.memory_space<vmem>>, %arg3: memref<32x64xf32, #tpu.memory_space<vmem>>, %arg4: memref<32x64xf32, #tpu.memory_space<vmem>>, %arg5: memref<32x64xbf16, #tpu.memory_space<vmem>>) attributes {dimension_semantics = [#tpu.dimension_semantics<parallel>], iteration_bounds = array<i64: 1>, scalar_prefetch = 0 : i64, scratch_operands = 0 : i64, tpu.core_type = #tpu.core_type<tc>, window_params = [{transform_indices = @transform_0, window_bounds = array<i64: 2>}, {transform_indices = @transform_1, window_bounds = array<i64: 32, 64>}, {transform_indices = @transform_2, window_bounds = array<i64: 32, 64>}, {transform_indices = @transform_3, window_bounds = array<i64: 32, 64>}, {transform_indices = @transform_4, window_bounds = array<i64: 32, 64>}]} {
    %c0 = arith.constant 0 : index
    %0 = memref.load %arg1[%c0] : memref<2xf32, #tpu.memory_space<smem>>
    %c1 = arith.constant 1 : index
    %1 = memref.load %arg1[%c1] : memref<2xf32, #tpu.memory_space<smem>>
    %c0_0 = arith.constant 0 : index
    %c0_1 = arith.constant 0 : index
    %2 = vector.load %arg2[%c0_0, %c0_1] : memref<32x64xf32, #tpu.memory_space<vmem>>, vector<32x64xf32>
    %3 = vector.broadcast %0 : f32 to vector<32x64xf32>
    %4 = arith.mulf %3, %2 : vector<32x64xf32>
    %c0_2 = arith.constant 0 : index
    %c0_3 = arith.constant 0 : index
    %5 = vector.load %arg3[%c0_2, %c0_3] : memref<32x64xf32, #tpu.memory_space<vmem>>, vector<32x64xf32>
    %6 = vector.broadcast %1 : f32 to vector<32x64xf32>
    %7 = arith.mulf %6, %5 : vector<32x64xf32>
    %8 = arith.addf %4, %7 : vector<32x64xf32>
    %c0_4 = arith.constant 0 : index
    %c0_5 = arith.constant 0 : index
    %9 = vector.load %arg4[%c0_4, %c0_5] : memref<32x64xf32, #tpu.memory_space<vmem>>, vector<32x64xf32>
    tpu.vector_store %arg4[%c0_4, %c0_5], %8 {strides = array<i32>} : memref<32x64xf32, #tpu.memory_space<vmem>>, vector<32x64xf32>,
    %10 = arith.mulf %8, %8 : vector<32x64xf32>
    %cst = arith.constant dense<0.000000e+00> : vector<32xf32>
    %11 = vector.multi_reduction <add>, %10, %cst [1] : vector<32x64xf32> to vector<32xf32>
    %12 = vector.shape_cast %11 : vector<32xf32> to vector<32x1xf32>
    %cst_6 = arith.constant 6.400000e+01 : f32
    %13 = vector.broadcast %cst_6 : f32 to vector<32x1xf32>
    %14 = arith.divf %12, %13 : vector<32x1xf32>
    %cst_7 = arith.constant 1.1920929E-7 : f32
    %15 = vector.broadcast %cst_7 : f32 to vector<32x1xf32>
    %16 = arith.addf %14, %15 : vector<32x1xf32>
    %17 = math.rsqrt %16 : vector<32x1xf32>
    %18 = vector.broadcast %17 : vector<32x1xf32> to vector<32x64xf32>
    %19 = arith.mulf %8, %18 : vector<32x64xf32>
    %20 = arith.truncf %19 : vector<32x64xf32> to vector<32x64xbf16>
    %c0_8 = arith.constant 0 : index
    %c0_9 = arith.constant 0 : index
    %21 = vector.load %arg5[%c0_8, %c0_9] : memref<32x64xbf16, #tpu.memory_space<vmem>>, vector<32x64xbf16>
    tpu.vector_store %arg5[%c0_8, %c0_9], %20 {strides = array<i32>} : memref<32x64xbf16, #tpu.memory_space<vmem>>, vector<32x64xbf16>,
    return
  }
  func.func @transform_0(%arg0: i32) -> i32 {
    %c0_i32 = arith.constant 0 : i32
    %c0_i32_0 = arith.constant 0 : i32
    return %c0_i32 : i32
  }
  func.func @transform_1(%arg0: i32) -> (i32, i32) {
    %c0_i32 = arith.constant 0 : i32
    %c0_i32_0 = arith.constant 0 : i32
    return %arg0, %c0_i32 : i32, i32
  }
  func.func @transform_2(%arg0: i32) -> (i32, i32) {
    %c0_i32 = arith.constant 0 : i32
    %c0_i32_0 = arith.constant 0 : i32
    return %arg0, %c0_i32 : i32, i32
  }
  func.func @transform_3(%arg0: i32) -> (i32, i32) {
    %c0_i32 = arith.constant 0 : i32
    %c0_i32_0 = arith.constant 0 : i32
    return %arg0, %c0_i32 : i32, i32
  }
  func.func @transform_4(%arg0: i32) -> (i32, i32) {
    %c0_i32 = arith.constant 0 : i32
    %c0_i32_0 = arith.constant 0 : i32
    return %arg0, %c0_i32 : i32, i32
  }
}

</mosaic_0001>

<llo_original>
// kernel: tpu_custom_call.1
$region0: #{tpu_custom_call.1}
  #allocation0 [shape = 'u32[]', space=smem, size = 0x4, offset = 0x4, fixed_abs, tag = 'smem constant byte address 0x4 - core index']
  #allocation1 [shape = 'u32[144,128]{1,0:T(1,128)}', space=vmem, size = 0x12000, scoped, tag = 'internal scratch']
  %s0 = inlined_call_operand.hbm [shape: f32[2], index: 0, kind: input, shape index: {}]
  %s1 = inlined_call_operand.hbm [shape: f32[32,64], index: 1, kind: input, shape index: {}]
  %s2 = inlined_call_operand.hbm [shape: f32[32,64], index: 2, kind: input, shape index: {}]
  %s3 = inlined_call_operand.hbm [shape: f32[32,64], index: 3, kind: output, shape index: {0}]
  %s4 = inlined_call_operand.hbm [shape: bf16[32,64], index: 4, kind: output, shape index: {1}]
  %5 = xla_tuple %s3, %s4
  %s6 = sld [smem:[#allocation0]]
  $region42: #{tpu_custom_call.1} parent=0
    _
  %s8 = ssub.s32 1, %s6
  %s9 = scalar_select 0, %s8, %s6
  $region1: #{tpu_custom_call.1} parent=0
    #allocation2 [shape = 'u8[512]{0}', space=smem, size = 0x200, scoped, tag = 'input window, operand 0, single buffered']
    #allocation3 [shape = 's32[1]{0}', space=sflag, size = 0x4, scoped, tag = 'scoped memory for tpu_custom_call.1']
    #allocation4 [shape = 's32[1]{0}', space=sflag, size = 0x4, scoped, tag = 'scoped memory for tpu_custom_call.1']
    #allocation5 [shape = 's32[1]{0}', space=sflag, size = 0x4, scoped, tag = 'scoped memory for tpu_custom_call.1']
    #allocation6 [shape = 'u8[16384]{0}', space=vmem, size = 0x4000, scoped, tag = 'input window, operand 1, single buffered']
    #allocation7 [shape = 'u8[16384]{0}', space=vmem, size = 0x4000, scoped, tag = 'input window, operand 2, single buffered']
    #allocation8 [shape = 's32[1]{0}', space=sflag, size = 0x4, scoped, tag = 'scoped memory for tpu_custom_call.1']
    #allocation9 [shape = 'u8[16384]{0}', space=vmem, size = 0x4000, scoped, tag = 'output window, operand 0, single buffered']
    #allocation10 [shape = 'u8[8192]{0}', space=vmem, size = 0x2000, scoped, tag = 'output window, operand 1, single buffered']
    #allocation11 [shape = 's32[1]{0}', space=sflag, size = 0x4, scoped, tag = 'scoped memory for tpu_custom_call.1']
    %10 = vsyncpa [#allocation5], 0
    %11 = vsyncpa [#allocation3], 0
    %12 = vsyncpa [#allocation8], 0
    %13 = vsyncpa [#allocation4], 0
    %14 = vsyncpa [#allocation11], 0
    // Predicated region
    $region2: #{tpu_custom_call.1} parent=1 // pred_check
      _
    $region3: #{tpu_custom_call.1} parent=1 // pred_check_branch
      %16 = sbr.rel (0) target = $region5
    $region4: #{tpu_custom_call.1} parent=1 // pred_region
      %s18 = ssub.s32 16, 16
      %19 = vsyncadd [#allocation5], %s18
      %22 = dma.hbm_to_smem %s0, 16, [#allocation2], [#allocation5]
    $region5: #{tpu_custom_call.1} parent=1 // pred_fallthru
      _
    // Predicated region
    $region6: #{tpu_custom_call.1} parent=1 // pred_check
      _
    $region7: #{tpu_custom_call.1} parent=1 // pred_check_branch
      %24 = sbr.rel (0) target = $region9
    $region8: #{tpu_custom_call.1} parent=1 // pred_region
      %s26 = ssub.s32 512, 512
      %27 = vsyncadd [#allocation3], %s26
      %s28 = sshll.u32 [#allocation6], 4
      %s29 = int_to_ptr.vmem [resolvable:$true] %s28
      %34 = dma.hbm_to_vmem [thread:$0]  %s1, 512, %s29, [#allocation3], 128, 128, 8
    $region9: #{tpu_custom_call.1} parent=1 // pred_fallthru
      _
    // Predicated region
    $region10: #{tpu_custom_call.1} parent=1 // pred_check
      _
    $region11: #{tpu_custom_call.1} parent=1 // pred_check_branch
      %36 = sbr.rel (0) target = $region13
    $region12: #{tpu_custom_call.1} parent=1 // pred_region
      %s38 = ssub.s32 512, 512
      %39 = vsyncadd [#allocation8], %s38
      %s40 = sshll.u32 [#allocation7], 4
      %s41 = int_to_ptr.vmem [resolvable:$true] %s40
      %46 = dma.hbm_to_vmem [thread:$0]  %s2, 512, %s41, [#allocation8], 128, 128, 8
    $region13: #{tpu_custom_call.1} parent=1 // pred_fallthru
      _
    // Predicated region
    $region14: #{tpu_custom_call.1} parent=1 // pred_check
      _
    $region15: #{tpu_custom_call.1} parent=1 // pred_check_branch
      %48 = sbr.rel (0) target = $region17
    $region16: #{tpu_custom_call.1} parent=1 // pred_region
      %49 = dma.done [#allocation5], 16
    $region17: #{tpu_custom_call.1} parent=1 // pred_fallthru
      _
    // Predicated region
    $region18: #{tpu_custom_call.1} parent=1 // pred_check
      _
    $region19: #{tpu_custom_call.1} parent=1 // pred_check_branch
      %51 = sbr.rel (0) target = $region21
    $region20: #{tpu_custom_call.1} parent=1 // pred_region
      %52 = dma.done [#allocation3], 512
    $region21: #{tpu_custom_call.1} parent=1 // pred_fallthru
      _
    // Predicated region
    $region22: #{tpu_custom_call.1} parent=1 // pred_check
      _
    $region23: #{tpu_custom_call.1} parent=1 // pred_check_branch
      %54 = sbr.rel (0) target = $region25
    $region24: #{tpu_custom_call.1} parent=1 // pred_region
      %55 = dma.done [#allocation8], 512
    $region25: #{tpu_custom_call.1} parent=1 // pred_fallthru
      _
    %56 = sfence
    %s57 = sld [smem:[#allocation2]]
    %s58 = sld [smem:[#allocation2 + $0x1]]
    %v59 = vld [vmem:[#allocation6] sm:$0xff]
    %v60 = vld [vmem:[#allocation6 + $0x8] sm:$0xff]
    %v61 = vld [vmem:[#allocation6 + $0x10] sm:$0xff]
    %v62 = vld [vmem:[#allocation6 + $0x18] sm:$0xff]
    %v63 = vstv %s57
    %v64 = vmul.f32 %v63, %v59
    %v65 = vmul.f32 %v63, %v60
    %v66 = vmul.f32 %v63, %v61
    %v67 = vmul.f32 %v63, %v62
    %v68 = vld [vmem:[#allocation7] sm:$0xff]
    %v69 = vld [vmem:[#allocation7 + $0x8] sm:$0xff]
    %v70 = vld [vmem:[#allocation7 + $0x10] sm:$0xff]
    %v71 = vld [vmem:[#allocation7 + $0x18] sm:$0xff]
    %v72 = vstv %s58
    %v73 = vmul.f32 %v72, %v68
    %v74 = vmul.f32 %v72, %v69
    %v75 = vmul.f32 %v72, %v70
    %v76 = vmul.f32 %v72, %v71
    %v77 = vadd.f32 %v64, %v73
    %v78 = vadd.f32 %v65, %v74
    %v79 = vadd.f32 %v66, %v75
    %v80 = vadd.f32 %v67, %v76
    %vm81 = vcmask 523264
    %82 = vst.msk [vmem:[#allocation9] sm:$0xff] %vm81, %v77
    %83 = vst.msk [vmem:[#allocation9 + $0x8] sm:$0xff] %vm81, %v78
    %84 = vst.msk [vmem:[#allocation9 + $0x10] sm:$0xff] %vm81, %v79
    %85 = vst.msk [vmem:[#allocation9 + $0x18] sm:$0xff] %vm81, %v80
    %v86 = vmul.f32 %v77, %v77
    %v87 = vmul.f32 %v78, %v78
    %v88 = vmul.f32 %v79, %v79
    %v89 = vmul.f32 %v80, %v80
    %v90 = vsel %vm81, %v86, 0.0
    %91 = vadd.xlane.f32.xlu0 %v90
    %v92 = vpop.xlane.xlu0 %91
    %v93 = vsel %vm81, %v87, 0.0
    %94 = vadd.xlane.f32.xlu0 %v93
    %v95 = vpop.xlane.xlu0 %94
    %v96 = vsel %vm81, %v88, 0.0
    %97 = vadd.xlane.f32.xlu0 %v96
    %v98 = vpop.xlane.xlu0 %97
    %v99 = vsel %vm81, %v89, 0.0
    %100 = vadd.xlane.f32.xlu0 %v99
    %v101 = vpop.xlane.xlu0 %100
    %v102 = vrcp.pop 64.0
    %v103 = vmul.f32 %v92, %v102
    %v104 = vmul.f32 %v95, %v102
    %v105 = vmul.f32 %v98, %v102
    %v106 = vmul.f32 %v101, %v102
    %v107 = vadd.f32 %v103, 1.1920929e-07
    %v108 = vadd.f32 %v104, 1.1920929e-07
    %v109 = vadd.f32 %v105, 1.1920929e-07
    %v110 = vadd.f32 %v106, 1.1920929e-07
    %v111 = vrsqrt.pop %v107
    %v112 = vrsqrt.pop %v108
    %v113 = vrsqrt.pop %v109
    %v114 = vrsqrt.pop %v110
    %v115 = vmul.f32 %v77, %v111
    %v116 = vmul.f32 %v78, %v112
    %v117 = vmul.f32 %v79, %v113
    %v118 = vmul.f32 %v80, %v114
    %v119 = vpack.c.bf16 %v116, %v115
    %v120 = vpack.c.bf16 %v118, %v117
    %v123 = vunpack.c.l.b16 %v119
    %v124 = vunpack.c.h.b16 %v119
    %v125 = vunpack.c.l.b16 %v120
    %v126 = vunpack.c.h.b16 %v120
    %v127 = vpack.c.b16 %v123, %v123
    %v128 = vpack.c.b16 %v124, %v124
    %v129 = vpack.c.b16 %v125, %v125
    %v130 = vpack.c.b16 %v126, %v126
    %vm135 = vcmask 519168
    %136 = vst.msk [vmem:[#allocation10] sm:$0xf] %vm135, %v127
    %137 = vst.msk [vmem:[#allocation10 + $0x4] sm:$0xf] %vm135, %v128
    %138 = vst.msk [vmem:[#allocation10 + $0x8] sm:$0xf] %vm135, %v129
    %139 = vst.msk [vmem:[#allocation10 + $0xc] sm:$0xf] %vm135, %v130
    // Predicated region
    $region26: #{tpu_custom_call.1} parent=1 // pred_check
      _
    $region27: #{tpu_custom_call.1} parent=1 // pred_check_branch
      %141 = sbr.rel (0) target = $region29
    $region28: #{tpu_custom_call.1} parent=1 // pred_region
      %s143 = ssub.s32 512, 512
      %144 = vsyncadd [#allocation4], %s143
      %s145 = sshll.u32 [#allocation9], 4
      %s146 = int_to_ptr.vmem [resolvable:$true] %s145
      %151 = dma.vmem_to_hbm [thread:$0]  %s146, 512, %s3, [#allocation4], 128, 128, 8
    $region29: #{tpu_custom_call.1} parent=1 // pred_fallthru
      _
    // Predicated region
    $region30: #{tpu_custom_call.1} parent=1 // pred_check
      _
    $region31: #{tpu_custom_call.1} parent=1 // pred_check_branch
      %153 = sbr.rel (0) target = $region33
    $region32: #{tpu_custom_call.1} parent=1 // pred_region
      %s155 = ssub.s32 256, 256
      %156 = vsyncadd [#allocation11], %s155
      %s157 = sshll.u32 [#allocation10], 4
      %s158 = int_to_ptr.vmem [resolvable:$true] %s157
      %163 = dma.vmem_to_hbm [thread:$0]  %s158, 256, %s4, [#allocation11], 64, 64, 4
    $region33: #{tpu_custom_call.1} parent=1 // pred_fallthru
      _
    // Predicated region
    $region34: #{tpu_custom_call.1} parent=1 // pred_check
      _
    $region35: #{tpu_custom_call.1} parent=1 // pred_check_branch
      %165 = sbr.rel (0) target = $region37
    $region36: #{tpu_custom_call.1} parent=1 // pred_region
      %166 = dma.done [#allocation4], 512
    $region37: #{tpu_custom_call.1} parent=1 // pred_fallthru
      _
    // Predicated region
    $region38: #{tpu_custom_call.1} parent=1 // pred_check
      _
    $region39: #{tpu_custom_call.1} parent=1 // pred_check_branch
      %168 = sbr.rel (0) target = $region41
    $region40: #{tpu_custom_call.1} parent=1 // pred_region
      %169 = dma.done [#allocation11], 256
    $region41: #{tpu_custom_call.1} parent=1 // pred_fallthru
      _
    %170 = vsyncpa [#allocation3], 1
    %171 = vsyncpa [#allocation8], 1
    %172 = vsyncpa [#allocation4], 1
    %173 = vsyncpa [#allocation11], 1
    %174 = vsyncpa [#allocation5], 1

</llo_original>
